<compile_context>
chip_gen: v7x
topology: tpu7x:2x2x1
jax: 0.10.0
libtpu: 0.0.40
codegen_flags: <defaults>
</compile_context>

<pallas_src>
import jax
import jax.numpy as jnp
from jax.experimental import pallas as pl
from jax.experimental.pallas import tpu as pltpu

EPS = 1e-5
LANE = 128


def _round_up(n, m):
    return (n + m - 1) // m * m


def _physical_vmem_bytes():
    """Physical VMEM per core; conservative 64 MiB (v7x) fallback if the query fails."""
    try:
        return int(pltpu.get_tpu_info().vmem_capacity_bytes)
    except Exception:
        return 64 * 1024 * 1024


def _pick_block_h(hid_p, cin_p, cout_p, n, budget_bytes, max_th=2048):
    """Largest hidden (K) tile TH (multiple of 128, divides hid_p, <= max_th) fitting VMEM.

    Budget: resident bf16 x block + resident f32 output block + bn2 stack + headroom (fixed),
    plus per-TH bytes for double-buffered bf16 w1/w2 tiles and the bn1 stack tile.
    """
    fixed = n * cin_p * 2 + n * cout_p * 4 + 8 * cout_p * 4 + (2 << 20)
    per_th = 2 * cin_p * 2 + 2 * cout_p * 2 + 2 * 8 * 4
    avail = max(budget_bytes - fixed, 0)
    best = 128
    cand = 128
    limit = min(hid_p, max_th)
    while cand <= limit:
        if hid_p % cand == 0 and cand * per_th <= avail:
            best = cand
        cand += 128
    return best


def _bn_train(h, gamma, beta):
    """Training-mode BatchNorm1d in f32: biased variance over the batch axis.

    The centered residual `d` is reused for variance and normalization; rsqrt lands on the
    otherwise-idle EUP slot.
    """
    mean = jnp.mean(h, axis=0, keepdims=True)
    d = h - mean
    var = jnp.mean(d * d, axis=0, keepdims=True)
    return d * jax.lax.rsqrt(var + EPS) * gamma + beta


def mlp_kernel(x_ref, w1_ref, bn1_ref, w2_ref, bn2_ref, o_ref):
    h_idx = pl.program_id(0)

    @pl.when(h_idx == 0)
    def _init():
        o_ref[...] = jnp.zeros_like(o_ref)

    # fc1 tile: (N, Cin) @ (Cin, TH) -- bf16 operands, f32 MXU accumulation.
    bn1 = bn1_ref[...]                      # (3, TH) f32: rows = bias1, gamma1, beta1
    h = jnp.dot(x_ref[...], w1_ref[...], preferred_element_type=jnp.float32)
    h = h + bn1[0:1]

    # bn1 (per-feature => exact under H tiling) + ReLU, all in f32.
    h = _bn_train(h, bn1[1:2], bn1[2:3])
    h = jnp.maximum(h, 0.0)

    # fc2 partial product for this H (K) tile: accumulate directly into the grid-resident
    # f32 output block (no separate VMEM scratch).
    o_ref[...] += jnp.dot(h.astype(jnp.bfloat16), w2_ref[...],
                          preferred_element_type=jnp.float32)

    # Finalize in place: bias2 + bn2, single lane-dense f32 store.
    @pl.when(h_idx == pl.num_programs(0) - 1)
    def _finalize():
        bn2 = bn2_ref[...]                  # (3, Cout) f32: rows = bias2, gamma2, beta2
        y = o_ref[...] + bn2[0:1]
        o_ref[...] = _bn_train(y, bn2[1:2], bn2[2:3])


def prepare_params(params):
    """One-time weight prep (hoisted out of the forward pass): pad to 128-lane multiples,
    cast weights to bf16, stack bias/gamma/beta into (3, features) f32 arrays."""
    cin, hid = params["w1"].shape
    cout = params["w2"].shape[1]
    cin_p = _round_up(cin, LANE)
    hid_p = _round_up(hid, LANE)
    cout_p = _round_up(cout, LANE)

    def pad2(a, rows, cols, dtype):
        return jnp.pad(a, ((0, rows - a.shape[0]), (0, cols - a.shape[1]))).astype(dtype)

    bn1 = jnp.concatenate([params["b1"], params["g1"], params["be1"]], axis=0)   # (3, hid)
    bn2 = jnp.concatenate([params["b2"], params["g2"], params["be2"]], axis=0)   # (3, cout)

    return {
        "cin": cin, "hid": hid, "cout": cout,
        "cin_p": cin_p, "hid_p": hid_p, "cout_p": cout_p,
        "w1": pad2(params["w1"], cin_p, hid_p, jnp.bfloat16),
        "w2": pad2(params["w2"], hid_p, cout_p, jnp.bfloat16),
        "bn1": pad2(bn1, 3, hid_p, jnp.float32),
        "bn2": pad2(bn2, 3, cout_p, jnp.float32),
    }


def _call_pallas(xp, prep, n, th, vmem_limit, single_buffer_invariant):
    cin_p, hid_p, cout_p = prep["cin_p"], prep["hid_p"], prep["cout_p"]
    grid = (hid_p // th,)

    def inv_spec(shape, imap):
        # Grid-invariant blocks: request a single VMEM buffer (constant index_map never
        # re-DMAs, so double-buffering is pure VMEM waste).
        if single_buffer_invariant:
            return pl.BlockSpec(shape, imap, pipeline_mode=pl.Buffered(1))
        return pl.BlockSpec(shape, imap)

    in_specs = [
        inv_spec((n, cin_p), lambda h: (0, 0)),          # x   (resident across grid)
        pl.BlockSpec((cin_p, th), lambda h: (0, h)),     # w1  tile (double-buffered DMA)
        pl.BlockSpec((3, th), lambda h: (0, h)),         # b1/g1/be1 stacked tile
        pl.BlockSpec((th, cout_p), lambda h: (h, 0)),    # w2  tile
        inv_spec((3, cout_p), lambda h: (0, 0)),         # b2/g2/be2 stacked (resident)
    ]
    out_spec = inv_spec((n, cout_p), lambda h: (0, 0))   # output doubles as f32 accumulator

    cost = pl.CostEstimate(
        flops=2 * n * cin_p * hid_p + 2 * n * hid_p * cout_p,
        transcendentals=hid_p + cout_p,                  # one rsqrt per BN feature
        bytes_accessed=(xp.size * 2 + prep["w1"].size * 2 + prep["w2"].size * 2
                        + prep["bn1"].size * 4 + prep["bn2"].size * 4
                        + n * cout_p * 4),
    )

    return pl.pallas_call(
        mlp_kernel,
        out_shape=jax.ShapeDtypeStruct((n, cout_p), jnp.float32),
        grid_spec=pltpu.PrefetchScalarGridSpec(
            num_scalar_prefetch=0,
            grid=grid,
            in_specs=in_specs,
            out_specs=out_spec,
        ),
        compiler_params=pltpu.CompilerParams(
            # Single grid axis is the fc2 K-reduction -> must be "arbitrary".
            # (v7x second-TC use would need an extra "parallel" cout/batch axis - not applied.)
            dimension_semantics=("arbitrary",),
            vmem_limit_bytes=vmem_limit,
        ),
        cost_estimate=cost,
    )(xp, prep["w1"], prep["bn1"], prep["w2"], prep["bn2"])


def mlp_forward(x, prep, *, max_block_h=2048):
    """x: (N, in_channels) f32. prep: output of prepare_params()."""
    n, cin = x.shape
    assert cin == prep["cin"], "input feature dim mismatch"
    cin_p, hid_p, cout_p = prep["cin_p"], prep["hid_p"], prep["cout_p"]

    # Pad x's feature dim to 128 lanes (zero pads are exact) and cast to bf16 for the MXU.
    xp = jnp.pad(x, ((0, 0), (0, cin_p - cin))).astype(jnp.bfloat16)

    # Per-generation VMEM budget: ~85% of physical (v5e/v6e 128 MiB -> ~108 MiB,
    # v7x 64 MiB -> ~54 MiB), then derive the largest hidden tile that fits.
    vmem_limit = min(int(_physical_vmem_bytes() * 0.85), 112 * 1024 * 1024)
    th = _pick_block_h(hid_p, cin_p, cout_p, n, vmem_limit, max_th=max_block_h)

    try:
        out_p = _call_pallas(xp, prep, n, th, vmem_limit, single_buffer_invariant=True)
        out_p = jax.block_until_ready(out_p)
    except Exception:
        # Fallback if this Pallas build rejects pipeline_mode=pl.Buffered(1).
        out_p = _call_pallas(xp, prep, n, th, vmem_limit, single_buffer_invariant=False)

    return out_p[:, :prep["cout"]]


def init_params(key, in_channels, hidden_channels, out_channels):
    """PyTorch-Linear-style init (uniform +-1/sqrt(fan_in)); BN gamma=1, beta=0."""
    k1, k2, k3, k4 = jax.random.split(key, 4)
    lim1 = 1.0 / (in_channels ** 0.5)
    lim2 = 1.0 / (hidden_channels ** 0.5)
    return {
        # weights stored transposed: (in, out)
        "w1": jax.random.uniform(k1, (in_channels, hidden_channels), jnp.float32, -lim1, lim1),
        "b1": jax.random.uniform(k2, (1, hidden_channels), jnp.float32, -lim1, lim1),
        "g1": jnp.ones((1, hidden_channels), jnp.float32),
        "be1": jnp.zeros((1, hidden_channels), jnp.float32),
        "w2": jax.random.uniform(k3, (hidden_channels, out_channels), jnp.float32, -lim2, lim2),
        "b2": jax.random.uniform(k4, (1, out_channels), jnp.float32, -lim2, lim2),
        "g2": jnp.ones((1, out_channels), jnp.float32),
        "be2": jnp.zeros((1, out_channels), jnp.float32),
    }


def mlp_reference_mixed(x, p):
    """Pure-JAX reference mirroring the kernel's numeric path (bf16 MXU in, f32 BN)."""
    h = jnp.dot(x.astype(jnp.bfloat16), p["w1"].astype(jnp.bfloat16),
                preferred_element_type=jnp.float32) + p["b1"]
    m = h.mean(0, keepdims=True)
    d = h - m
    v = (d * d).mean(0, keepdims=True)
    h = jnp.maximum(d * jax.lax.rsqrt(v + EPS) * p["g1"] + p["be1"], 0.0)
    y = jnp.dot(h.astype(jnp.bfloat16), p["w2"].astype(jnp.bfloat16),
                preferred_element_type=jnp.float32) + p["b2"]
    m2 = y.mean(0, keepdims=True)
    d2 = y - m2
    v2 = (d2 * d2).mean(0, keepdims=True)
    return d2 * jax.lax.rsqrt(v2 + EPS) * p["g2"] + p["be2"]


def mlp_reference_f32(x, p):
    """Full-f32 reference of the PyTorch module (training-mode BN)."""
    h = x @ p["w1"] + p["b1"]
    m = h.mean(0, keepdims=True)
    v = ((h - m) ** 2).mean(0, keepdims=True)
    h = jnp.maximum((h - m) / jnp.sqrt(v + EPS) * p["g1"] + p["be1"], 0.0)
    y = h @ p["w2"] + p["b2"]
    m2 = y.mean(0, keepdims=True)
    v2 = ((y - m2) ** 2).mean(0, keepdims=True)
    return (y - m2) / jnp.sqrt(v2 + EPS) * p["g2"] + p["be2"]


if __name__ == "__main__":
    key = jax.random.PRNGKey(0)
    kx, kp = jax.random.split(key)

    batch, in_channels, hidden_channels, out_channels = 8, 16, 32, 16
    x = jax.random.normal(kx, (batch, in_channels), dtype=jnp.float32)
    params = init_params(kp, in_channels, hidden_channels, out_channels)

    prep = prepare_params(params)          # one-time padded/bf16 weight prep (hoisted)
    out = mlp_forward(x, prep)
    out = jax.block_until_ready(out)
    assert out.shape == (batch, out_channels)

    ref_mixed = mlp_reference_mixed(x, params)   # same numeric path as the kernel
    ref_f32 = mlp_reference_f32(x, params)       # module semantics in full f32
    assert jnp.allclose(out, ref_mixed, atol=5e-3, rtol=5e-3), "mismatch vs. mixed-precision reference"
    assert jnp.allclose(out, ref_f32, atol=1e-1, rtol=1e-1), "mismatch vs. f32 module reference"

    print("KERNEL_OK")
</pallas_src>

<mosaic_0001>
module attributes {stable_mosaic.version = 11 : i64} {
  func.func @mlp_kernel(%arg0: i32, %arg1: memref<8x128xbf16, #tpu.memory_space<vmem>>, %arg2: memref<128x128xbf16, #tpu.memory_space<vmem>>, %arg3: memref<3x128xf32, #tpu.memory_space<vmem>>, %arg4: memref<128x128xbf16, #tpu.memory_space<vmem>>, %arg5: memref<3x128xf32, #tpu.memory_space<vmem>>, %arg6: memref<8x128xf32, #tpu.memory_space<vmem>>) attributes {dimension_semantics = [#tpu.dimension_semantics<arbitrary>], iteration_bounds = array<i64: 1>, scalar_prefetch = 0 : i64, scratch_operands = 0 : i64, tpu.core_type = #tpu.core_type<tc>, window_params = [{pipeline_mode = #tpu.pipeline_mode<synchronous>, transform_indices = @transform_0, window_bounds = array<i64: 8, 128>}, {transform_indices = @transform_1, window_bounds = array<i64: 128, 128>}, {transform_indices = @transform_2, window_bounds = array<i64: 3, 128>}, {transform_indices = @transform_3, window_bounds = array<i64: 128, 128>}, {pipeline_mode = #tpu.pipeline_mode<synchronous>, transform_indices = @transform_4, window_bounds = array<i64: 3, 128>}, {pipeline_mode = #tpu.pipeline_mode<synchronous>, transform_indices = @transform_5, window_bounds = array<i64: 8, 128>}]} {
    %c0_i32 = arith.constant 0 : i32
    %0 = arith.cmpi eq, %arg0, %c0_i32 : i32
    %1 = arith.extui %0 : i1 to i32
    %c0_i32_0 = arith.constant 0 : i32
    %2 = arith.cmpi ne, %1, %c0_i32_0 : i32
    scf.if %2 {
      %cst_21 = arith.constant 0.000000e+00 : f32
      %43 = vector.broadcast %cst_21 : f32 to vector<8x128xf32>
      %c0_22 = arith.constant 0 : index
      %c0_23 = arith.constant 0 : index
      %44 = vector.load %arg6[%c0_22, %c0_23] : memref<8x128xf32, #tpu.memory_space<vmem>>, vector<8x128xf32>
      tpu.vector_store %arg6[%c0_22, %c0_23], %43 {strides = array<i32>} : memref<8x128xf32, #tpu.memory_space<vmem>>, vector<8x128xf32>,
    } else {
    }
    %c0 = arith.constant 0 : index
    %c0_1 = arith.constant 0 : index
    %3 = vector.load %arg3[%c0, %c0_1] : memref<3x128xf32, #tpu.memory_space<vmem>>, vector<3x128xf32>
    %c0_2 = arith.constant 0 : index
    %c0_3 = arith.constant 0 : index
    %4 = vector.load %arg1[%c0_2, %c0_3] : memref<8x128xbf16, #tpu.memory_space<vmem>>, vector<8x128xbf16>
    %c0_4 = arith.constant 0 : index
    %c0_5 = arith.constant 0 : index
    %5 = vector.load %arg2[%c0_4, %c0_5] : memref<128x128xbf16, #tpu.memory_space<vmem>>, vector<128x128xbf16>
    %cst = arith.constant dense<0.000000e+00> : vector<8x128xf32>
    %6 = tpu.matmul %4, %5, %cst {dimension_numbers = #tpu.dot_dimension_numbers<[1], [0], [0], [1], [0, 0, 1, 1], [], []>} : vector<8x128xbf16>, vector<128x128xbf16>, vector<8x128xf32> -> vector<8x128xf32>
    %7 = vector.extract_strided_slice %3 {offsets = [0, 0], sizes = [1, 128], strides = [1, 1]} : vector<3x128xf32> to vector<1x128xf32>
    %8 = vector.broadcast %7 : vector<1x128xf32> to vector<8x128xf32>
    %9 = arith.addf %6, %8 : vector<8x128xf32>
    %10 = vector.extract_strided_slice %3 {offsets = [1, 0], sizes = [1, 128], strides = [1, 1]} : vector<3x128xf32> to vector<1x128xf32>
    %11 = vector.extract_strided_slice %3 {offsets = [2, 0], sizes = [1, 128], strides = [1, 1]} : vector<3x128xf32> to vector<1x128xf32>
    %cst_6 = arith.constant dense<0.000000e+00> : vector<128xf32>
    %12 = vector.multi_reduction <add>, %9, %cst_6 [0] : vector<8x128xf32> to vector<128xf32>
    %13 = vector.shape_cast %12 : vector<128xf32> to vector<1x128xf32>
    %cst_7 = arith.constant 8.000000e+00 : f32
    %14 = vector.broadcast %cst_7 : f32 to vector<1x128xf32>
    %15 = arith.divf %13, %14 : vector<1x128xf32>
    %16 = vector.broadcast %15 : vector<1x128xf32> to vector<8x128xf32>
    %17 = arith.subf %9, %16 : vector<8x128xf32>
    %18 = arith.mulf %17, %17 : vector<8x128xf32>
    %cst_8 = arith.constant dense<0.000000e+00> : vector<128xf32>
    %19 = vector.multi_reduction <add>, %18, %cst_8 [0] : vector<8x128xf32> to vector<128xf32>
    %20 = vector.shape_cast %19 : vector<128xf32> to vector<1x128xf32>
    %cst_9 = arith.constant 8.000000e+00 : f32
    %21 = vector.broadcast %cst_9 : f32 to vector<1x128xf32>
    %22 = arith.divf %20, %21 : vector<1x128xf32>
    %cst_10 = arith.constant 9.99999974E-6 : f32
    %23 = vector.broadcast %cst_10 : f32 to vector<1x128xf32>
    %24 = arith.addf %22, %23 : vector<1x128xf32>
    %25 = math.rsqrt %24 : vector<1x128xf32>
    %26 = vector.broadcast %25 : vector<1x128xf32> to vector<8x128xf32>
    %27 = arith.mulf %17, %26 : vector<8x128xf32>
    %28 = vector.broadcast %10 : vector<1x128xf32> to vector<8x128xf32>
    %29 = arith.mulf %27, %28 : vector<8x128xf32>
    %30 = vector.broadcast %11 : vector<1x128xf32> to vector<8x128xf32>
    %31 = arith.addf %29, %30 : vector<8x128xf32>
    %cst_11 = arith.constant 0.000000e+00 : f32
    %32 = vector.broadcast %cst_11 : f32 to vector<8x128xf32>
    %33 = arith.maximumf %31, %32 : vector<8x128xf32>
    %c0_12 = arith.constant 0 : index
    %c0_13 = arith.constant 0 : index
    %34 = vector.load %arg6[%c0_12, %c0_13] : memref<8x128xf32, #tpu.memory_space<vmem>>, vector<8x128xf32>
    %35 = arith.truncf %33 : vector<8x128xf32> to vector<8x128xbf16>
    %c0_14 = arith.constant 0 : index
    %c0_15 = arith.constant 0 : index
    %36 = vector.load %arg4[%c0_14, %c0_15] : memref<128x128xbf16, #tpu.memory_space<vmem>>, vector<128x128xbf16>
    %cst_16 = arith.constant dense<0.000000e+00> : vector<8x128xf32>
    %37 = tpu.matmul %35, %36, %cst_16 {dimension_numbers = #tpu.dot_dimension_numbers<[1], [0], [0], [1], [0, 0, 1, 1], [], []>} : vector<8x128xbf16>, vector<128x128xbf16>, vector<8x128xf32> -> vector<8x128xf32>
    %38 = arith.addf %34, %37 : vector<8x128xf32>
    %c0_17 = arith.constant 0 : index
    %c0_18 = arith.constant 0 : index
    %39 = vector.load %arg6[%c0_17, %c0_18] : memref<8x128xf32, #tpu.memory_space<vmem>>, vector<8x128xf32>
    tpu.vector_store %arg6[%c0_17, %c0_18], %38 {strides = array<i32>} : memref<8x128xf32, #tpu.memory_space<vmem>>, vector<8x128xf32>,
    %c0_i32_19 = arith.constant 0 : i32
    %40 = arith.cmpi eq, %arg0, %c0_i32_19 : i32
    %41 = arith.extui %40 : i1 to i32
    %c0_i32_20 = arith.constant 0 : i32
    %42 = arith.cmpi ne, %41, %c0_i32_20 : i32
    scf.if %42 {
      %c0_21 = arith.constant 0 : index
      %c0_22 = arith.constant 0 : index
      %43 = vector.load %arg5[%c0_21, %c0_22] : memref<3x128xf32, #tpu.memory_space<vmem>>, vector<3x128xf32>
      %c0_23 = arith.constant 0 : index
      %c0_24 = arith.constant 0 : index
      %44 = vector.load %arg6[%c0_23, %c0_24] : memref<8x128xf32, #tpu.memory_space<vmem>>, vector<8x128xf32>
      %45 = vector.extract_strided_slice %43 {offsets = [0, 0], sizes = [1, 128], strides = [1, 1]} : vector<3x128xf32> to vector<1x128xf32>
      %46 = vector.broadcast %45 : vector<1x128xf32> to vector<8x128xf32>
      %47 = arith.addf %44, %46 : vector<8x128xf32>
      %48 = vector.extract_strided_slice %43 {offsets = [1, 0], sizes = [1, 128], strides = [1, 1]} : vector<3x128xf32> to vector<1x128xf32>
      %49 = vector.extract_strided_slice %43 {offsets = [2, 0], sizes = [1, 128], strides = [1, 1]} : vector<3x128xf32> to vector<1x128xf32>
      %cst_25 = arith.constant dense<0.000000e+00> : vector<128xf32>
      %50 = vector.multi_reduction <add>, %47, %cst_25 [0] : vector<8x128xf32> to vector<128xf32>
      %51 = vector.shape_cast %50 : vector<128xf32> to vector<1x128xf32>
      %cst_26 = arith.constant 8.000000e+00 : f32
      %52 = vector.broadcast %cst_26 : f32 to vector<1x128xf32>
      %53 = arith.divf %51, %52 : vector<1x128xf32>
      %54 = vector.broadcast %53 : vector<1x128xf32> to vector<8x128xf32>
      %55 = arith.subf %47, %54 : vector<8x128xf32>
      %56 = arith.mulf %55, %55 : vector<8x128xf32>
      %cst_27 = arith.constant dense<0.000000e+00> : vector<128xf32>
      %57 = vector.multi_reduction <add>, %56, %cst_27 [0] : vector<8x128xf32> to vector<128xf32>
      %58 = vector.shape_cast %57 : vector<128xf32> to vector<1x128xf32>
      %cst_28 = arith.constant 8.000000e+00 : f32
      %59 = vector.broadcast %cst_28 : f32 to vector<1x128xf32>
      %60 = arith.divf %58, %59 : vector<1x128xf32>
      %cst_29 = arith.constant 9.99999974E-6 : f32
      %61 = vector.broadcast %cst_29 : f32 to vector<1x128xf32>
      %62 = arith.addf %60, %61 : vector<1x128xf32>
      %63 = math.rsqrt %62 : vector<1x128xf32>
      %64 = vector.broadcast %63 : vector<1x128xf32> to vector<8x128xf32>
      %65 = arith.mulf %55, %64 : vector<8x128xf32>
      %66 = vector.broadcast %48 : vector<1x128xf32> to vector<8x128xf32>
      %67 = arith.mulf %65, %66 : vector<8x128xf32>
      %68 = vector.broadcast %49 : vector<1x128xf32> to vector<8x128xf32>
      %69 = arith.addf %67, %68 : vector<8x128xf32>
      %c0_30 = arith.constant 0 : index
      %c0_31 = arith.constant 0 : index
      %70 = vector.load %arg6[%c0_30, %c0_31] : memref<8x128xf32, #tpu.memory_space<vmem>>, vector<8x128xf32>
      tpu.vector_store %arg6[%c0_30, %c0_31], %69 {strides = array<i32>} : memref<8x128xf32, #tpu.memory_space<vmem>>, vector<8x128xf32>,
    } else {
    }
    return
  }
  func.func @transform_0(%arg0: i32) -> (i32, i32) {
    %c0_i32 = arith.constant 0 : i32
    %c0_i32_0 = arith.constant 0 : i32
    %c0_i32_1 = arith.constant 0 : i32
    return %c0_i32, %c0_i32_0 : i32, i32
  }
  func.func @transform_1(%arg0: i32) -> (i32, i32) {
    %c0_i32 = arith.constant 0 : i32
    %c0_i32_0 = arith.constant 0 : i32
    return %c0_i32, %arg0 : i32, i32
  }
  func.func @transform_2(%arg0: i32) -> (i32, i32) {
    %c0_i32 = arith.constant 0 : i32
    %c0_i32_0 = arith.constant 0 : i32
    return %c0_i32, %arg0 : i32, i32
  }
  func.func @transform_3(%arg0: i32) -> (i32, i32) {
    %c0_i32 = arith.constant 0 : i32
    %c0_i32_0 = arith.constant 0 : i32
    return %arg0, %c0_i32 : i32, i32
  }
  func.func @transform_4(%arg0: i32) -> (i32, i32) {
    %c0_i32 = arith.constant 0 : i32
    %c0_i32_0 = arith.constant 0 : i32
    %c0_i32_1 = arith.constant 0 : i32
    return %c0_i32, %c0_i32_0 : i32, i32
  }
  func.func @transform_5(%arg0: i32) -> (i32, i32) {
    %c0_i32 = arith.constant 0 : i32
    %c0_i32_0 = arith.constant 0 : i32
    %c0_i32_1 = arith.constant 0 : i32
    return %c0_i32, %c0_i32_0 : i32, i32
  }
}

module attributes {stable_mosaic.version = 11 : i64} {
  func.func @mlp_kernel(%arg0: i32, %arg1: memref<8x128xbf16, #tpu.memory_space<vmem>>, %arg2: memref<128x128xbf16, #tpu.memory_space<vmem>>, %arg3: memref<3x128xf32, #tpu.memory_space<vmem>>, %arg4: memref<128x128xbf16, #tpu.memory_space<vmem>>, %arg5: memref<3x128xf32, #tpu.memory_space<vmem>>, %arg6: memref<8x128xf32, #tpu.memory_space<vmem>>) attributes {dimension_semantics = [#tpu.dimension_semantics<arbitrary>], iteration_bounds = array<i64: 1>, scalar_prefetch = 0 : i64, scratch_operands = 0 : i64, tpu.core_type = #tpu.core_type<tc>, window_params = [{pipeline_mode = #tpu.pipeline_mode<synchronous>, transform_indices = @transform_0, window_bounds = array<i64: 8, 128>}, {transform_indices = @transform_1, window_bounds = array<i64: 128, 128>}, {transform_indices = @transform_2, window_bounds = array<i64: 3, 128>}, {transform_indices = @transform_3, window_bounds = array<i64: 128, 128>}, {pipeline_mode = #tpu.pipeline_mode<synchronous>, transform_indices = @transform_4, window_bounds = array<i64: 3, 128>}, {pipeline_mode = #tpu.pipeline_mode<synchronous>, transform_indices = @transform_5, window_bounds = array<i64: 8, 128>}]} {
    %c0_i32 = arith.constant 0 : i32
    %0 = arith.cmpi eq, %arg0, %c0_i32 : i32
    %1 = arith.extui %0 : i1 to i32
    %c0_i32_0 = arith.constant 0 : i32
    %2 = arith.cmpi ne, %1, %c0_i32_0 : i32
    scf.if %2 {
      %cst_21 = arith.constant 0.000000e+00 : f32
      %43 = vector.broadcast %cst_21 : f32 to vector<8x128xf32>
      %c0_22 = arith.constant 0 : index
      %c0_23 = arith.constant 0 : index
      %44 = vector.load %arg6[%c0_22, %c0_23] : memref<8x128xf32, #tpu.memory_space<vmem>>, vector<8x128xf32>
      tpu.vector_store %arg6[%c0_22, %c0_23], %43 {strides = array<i32>} : memref<8x128xf32, #tpu.memory_space<vmem>>, vector<8x128xf32>,
    } else {
    }
    %c0 = arith.constant 0 : index
    %c0_1 = arith.constant 0 : index
    %3 = vector.load %arg3[%c0, %c0_1] : memref<3x128xf32, #tpu.memory_space<vmem>>, vector<3x128xf32>
    %c0_2 = arith.constant 0 : index
    %c0_3 = arith.constant 0 : index
    %4 = vector.load %arg1[%c0_2, %c0_3] : memref<8x128xbf16, #tpu.memory_space<vmem>>, vector<8x128xbf16>
    %c0_4 = arith.constant 0 : index
    %c0_5 = arith.constant 0 : index
    %5 = vector.load %arg2[%c0_4, %c0_5] : memref<128x128xbf16, #tpu.memory_space<vmem>>, vector<128x128xbf16>
    %cst = arith.constant dense<0.000000e+00> : vector<8x128xf32>
    %6 = tpu.matmul %4, %5, %cst {dimension_numbers = #tpu.dot_dimension_numbers<[1], [0], [0], [1], [0, 0, 1, 1], [], []>} : vector<8x128xbf16>, vector<128x128xbf16>, vector<8x128xf32> -> vector<8x128xf32>
    %7 = vector.extract_strided_slice %3 {offsets = [0, 0], sizes = [1, 128], strides = [1, 1]} : vector<3x128xf32> to vector<1x128xf32>
    %8 = vector.broadcast %7 : vector<1x128xf32> to vector<8x128xf32>
    %9 = arith.addf %6, %8 : vector<8x128xf32>
    %10 = vector.extract_strided_slice %3 {offsets = [1, 0], sizes = [1, 128], strides = [1, 1]} : vector<3x128xf32> to vector<1x128xf32>
    %11 = vector.extract_strided_slice %3 {offsets = [2, 0], sizes = [1, 128], strides = [1, 1]} : vector<3x128xf32> to vector<1x128xf32>
    %cst_6 = arith.constant dense<0.000000e+00> : vector<128xf32>
    %12 = vector.multi_reduction <add>, %9, %cst_6 [0] : vector<8x128xf32> to vector<128xf32>
    %13 = vector.shape_cast %12 : vector<128xf32> to vector<1x128xf32>
    %cst_7 = arith.constant 8.000000e+00 : f32
    %14 = vector.broadcast %cst_7 : f32 to vector<1x128xf32>
    %15 = arith.divf %13, %14 : vector<1x128xf32>
    %16 = vector.broadcast %15 : vector<1x128xf32> to vector<8x128xf32>
    %17 = arith.subf %9, %16 : vector<8x128xf32>
    %18 = arith.mulf %17, %17 : vector<8x128xf32>
    %cst_8 = arith.constant dense<0.000000e+00> : vector<128xf32>
    %19 = vector.multi_reduction <add>, %18, %cst_8 [0] : vector<8x128xf32> to vector<128xf32>
    %20 = vector.shape_cast %19 : vector<128xf32> to vector<1x128xf32>
    %cst_9 = arith.constant 8.000000e+00 : f32
    %21 = vector.broadcast %cst_9 : f32 to vector<1x128xf32>
    %22 = arith.divf %20, %21 : vector<1x128xf32>
    %cst_10 = arith.constant 9.99999974E-6 : f32
    %23 = vector.broadcast %cst_10 : f32 to vector<1x128xf32>
    %24 = arith.addf %22, %23 : vector<1x128xf32>
    %25 = math.rsqrt %24 : vector<1x128xf32>
    %26 = vector.broadcast %25 : vector<1x128xf32> to vector<8x128xf32>
    %27 = arith.mulf %17, %26 : vector<8x128xf32>
    %28 = vector.broadcast %10 : vector<1x128xf32> to vector<8x128xf32>
    %29 = arith.mulf %27, %28 : vector<8x128xf32>
    %30 = vector.broadcast %11 : vector<1x128xf32> to vector<8x128xf32>
    %31 = arith.addf %29, %30 : vector<8x128xf32>
    %cst_11 = arith.constant 0.000000e+00 : f32
    %32 = vector.broadcast %cst_11 : f32 to vector<8x128xf32>
    %33 = arith.maximumf %31, %32 : vector<8x128xf32>
    %c0_12 = arith.constant 0 : index
    %c0_13 = arith.constant 0 : index
    %34 = vector.load %arg6[%c0_12, %c0_13] : memref<8x128xf32, #tpu.memory_space<vmem>>, vector<8x128xf32>
    %35 = arith.truncf %33 : vector<8x128xf32> to vector<8x128xbf16>
    %c0_14 = arith.constant 0 : index
    %c0_15 = arith.constant 0 : index
    %36 = vector.load %arg4[%c0_14, %c0_15] : memref<128x128xbf16, #tpu.memory_space<vmem>>, vector<128x128xbf16>
    %cst_16 = arith.constant dense<0.000000e+00> : vector<8x128xf32>
    %37 = tpu.matmul %35, %36, %cst_16 {dimension_numbers = #tpu.dot_dimension_numbers<[1], [0], [0], [1], [0, 0, 1, 1], [], []>} : vector<8x128xbf16>, vector<128x128xbf16>, vector<8x128xf32> -> vector<8x128xf32>
    %38 = arith.addf %34, %37 : vector<8x128xf32>
    %c0_17 = arith.constant 0 : index
    %c0_18 = arith.constant 0 : index
    %39 = vector.load %arg6[%c0_17, %c0_18] : memref<8x128xf32, #tpu.memory_space<vmem>>, vector<8x128xf32>
    tpu.vector_store %arg6[%c0_17, %c0_18], %38 {strides = array<i32>} : memref<8x128xf32, #tpu.memory_space<vmem>>, vector<8x128xf32>,
    %c0_i32_19 = arith.constant 0 : i32
    %40 = arith.cmpi eq, %arg0, %c0_i32_19 : i32
    %41 = arith.extui %40 : i1 to i32
    %c0_i32_20 = arith.constant 0 : i32
    %42 = arith.cmpi ne, %41, %c0_i32_20 : i32
    scf.if %42 {
      %c0_21 = arith.constant 0 : index
      %c0_22 = arith.constant 0 : index
      %43 = vector.load %arg5[%c0_21, %c0_22] : memref<3x128xf32, #tpu.memory_space<vmem>>, vector<3x128xf32>
      %c0_23 = arith.constant 0 : index
      %c0_24 = arith.constant 0 : index
      %44 = vector.load %arg6[%c0_23, %c0_24] : memref<8x128xf32, #tpu.memory_space<vmem>>, vector<8x128xf32>
      %45 = vector.extract_strided_slice %43 {offsets = [0, 0], sizes = [1, 128], strides = [1, 1]} : vector<3x128xf32> to vector<1x128xf32>
      %46 = vector.broadcast %45 : vector<1x128xf32> to vector<8x128xf32>
      %47 = arith.addf %44, %46 : vector<8x128xf32>
      %48 = vector.extract_strided_slice %43 {offsets = [1, 0], sizes = [1, 128], strides = [1, 1]} : vector<3x128xf32> to vector<1x128xf32>
      %49 = vector.extract_strided_slice %43 {offsets = [2, 0], sizes = [1, 128], strides = [1, 1]} : vector<3x128xf32> to vector<1x128xf32>
      %cst_25 = arith.constant dense<0.000000e+00> : vector<128xf32>
      %50 = vector.multi_reduction <add>, %47, %cst_25 [0] : vector<8x128xf32> to vector<128xf32>
      %51 = vector.shape_cast %50 : vector<128xf32> to vector<1x128xf32>
      %cst_26 = arith.constant 8.000000e+00 : f32
      %52 = vector.broadcast %cst_26 : f32 to vector<1x128xf32>
      %53 = arith.divf %51, %52 : vector<1x128xf32>
      %54 = vector.broadcast %53 : vector<1x128xf32> to vector<8x128xf32>
      %55 = arith.subf %47, %54 : vector<8x128xf32>
      %56 = arith.mulf %55, %55 : vector<8x128xf32>
      %cst_27 = arith.constant dense<0.000000e+00> : vector<128xf32>
      %57 = vector.multi_reduction <add>, %56, %cst_27 [0] : vector<8x128xf32> to vector<128xf32>
      %58 = vector.shape_cast %57 : vector<128xf32> to vector<1x128xf32>
      %cst_28 = arith.constant 8.000000e+00 : f32
      %59 = vector.broadcast %cst_28 : f32 to vector<1x128xf32>
      %60 = arith.divf %58, %59 : vector<1x128xf32>
      %cst_29 = arith.constant 9.99999974E-6 : f32
      %61 = vector.broadcast %cst_29 : f32 to vector<1x128xf32>
      %62 = arith.addf %60, %61 : vector<1x128xf32>
      %63 = math.rsqrt %62 : vector<1x128xf32>
      %64 = vector.broadcast %63 : vector<1x128xf32> to vector<8x128xf32>
      %65 = arith.mulf %55, %64 : vector<8x128xf32>
      %66 = vector.broadcast %48 : vector<1x128xf32> to vector<8x128xf32>
      %67 = arith.mulf %65, %66 : vector<8x128xf32>
      %68 = vector.broadcast %49 : vector<1x128xf32> to vector<8x128xf32>
      %69 = arith.addf %67, %68 : vector<8x128xf32>
      %c0_30 = arith.constant 0 : index
      %c0_31 = arith.constant 0 : index
      %70 = vector.load %arg6[%c0_30, %c0_31] : memref<8x128xf32, #tpu.memory_space<vmem>>, vector<8x128xf32>
      tpu.vector_store %arg6[%c0_30, %c0_31], %69 {strides = array<i32>} : memref<8x128xf32, #tpu.memory_space<vmem>>, vector<8x128xf32>,
    } else {
    }
    return
  }
  func.func @transform_0(%arg0: i32) -> (i32, i32) {
    %c0_i32 = arith.constant 0 : i32
    %c0_i32_0 = arith.constant 0 : i32
    %c0_i32_1 = arith.constant 0 : i32
    return %c0_i32, %c0_i32_0 : i32, i32
  }
  func.func @transform_1(%arg0: i32) -> (i32, i32) {
    %c0_i32 = arith.constant 0 : i32
    %c0_i32_0 = arith.constant 0 : i32
    return %c0_i32, %arg0 : i32, i32
  }
  func.func @transform_2(%arg0: i32) -> (i32, i32) {
    %c0_i32 = arith.constant 0 : i32
    %c0_i32_0 = arith.constant 0 : i32
    return %c0_i32, %arg0 : i32, i32
  }
  func.func @transform_3(%arg0: i32) -> (i32, i32) {
    %c0_i32 = arith.constant 0 : i32
    %c0_i32_0 = arith.constant 0 : i32
    return %arg0, %c0_i32 : i32, i32
  }
  func.func @transform_4(%arg0: i32) -> (i32, i32) {
    %c0_i32 = arith.constant 0 : i32
    %c0_i32_0 = arith.constant 0 : i32
    %c0_i32_1 = arith.constant 0 : i32
    return %c0_i32, %c0_i32_0 : i32, i32
  }
  func.func @transform_5(%arg0: i32) -> (i32, i32) {
    %c0_i32 = arith.constant 0 : i32
    %c0_i32_0 = arith.constant 0 : i32
    %c0_i32_1 = arith.constant 0 : i32
    return %c0_i32, %c0_i32_0 : i32, i32
  }
}

</mosaic_0001>

<llo_original>
// kernel: tpu_custom_call.1
$region0: #{tpu_custom_call.1}
  #allocation0 [shape = 'u32[]', space=smem, size = 0x4, offset = 0x4, fixed_abs, tag = 'smem constant byte address 0x4 - core index']
  #allocation1 [shape = 'u32[144,128]{1,0:T(1,128)}', space=vmem, size = 0x12000, scoped, tag = 'internal scratch']
  %s0 = inlined_call_operand.hbm [shape: bf16[8,128], index: 0, kind: input, shape index: {}]
  %s1 = inlined_call_operand.hbm [shape: bf16[128,128], index: 1, kind: input, shape index: {}]
  %s2 = inlined_call_operand.vmem [shape: f32[3,128], index: 2, kind: input, shape index: {}]
  %s3 = inlined_call_operand.hbm [shape: bf16[128,128], index: 3, kind: input, shape index: {}]
  %s4 = inlined_call_operand.vmem [shape: f32[3,128], index: 4, kind: input, shape index: {}]
  %s5 = inlined_call_operand.hbm [shape: f32[8,128], index: 5, kind: output, shape index: {}]
  %s6 = sld [smem:[#allocation0]]
  $region50: #{tpu_custom_call.1} parent=0
    _
  %s8 = ssub.s32 1, %s6
  %s9 = scalar_select 0, %s8, %s6
  $region1: #{tpu_custom_call.1} parent=0
    #allocation2 [shape = 'u8[2048]{0}', space=vmem, size = 0x800, scoped, tag = 'input window, operand 0, single buffered']
    #allocation3 [shape = 's32[1]{0}', space=sflag, size = 0x4, scoped, tag = 'scoped memory for tpu_custom_call.1']
    #allocation4 [shape = 's32[1]{0}', space=sflag, size = 0x4, scoped, tag = 'scoped memory for tpu_custom_call.1']
    #allocation5 [shape = 'u8[32768]{0}', space=vmem, size = 0x8000, scoped, tag = 'input window, operand 1, single buffered']
    #allocation6 [shape = 's32[1]{0}', space=sflag, size = 0x4, scoped, tag = 'scoped memory for tpu_custom_call.1']
    #allocation7 [shape = 'u8[32768]{0}', space=vmem, size = 0x8000, scoped, tag = 'input window, operand 3, single buffered']
    #allocation8 [shape = 'u8[4096]{0}', space=vmem, size = 0x1000, scoped, tag = 'output window, operand 0, single buffered']
    %10 = vsyncpa [#allocation3], 0
    %11 = vsyncpa [#allocation6], 0
    %12 = vsyncpa [#allocation4], 0
    // Predicated region
    $region2: #{tpu_custom_call.1} parent=1 // pred_check
      _
    $region3: #{tpu_custom_call.1} parent=1 // pred_check_branch
      %14 = sbr.rel (0) target = $region5
    $region4: #{tpu_custom_call.1} parent=1 // pred_region
      %s16 = ssub.s32 64, 64
      %17 = vsyncadd [#allocation3], %s16
      %s19 = sshll.u32 [#allocation2], 4
      %s20 = int_to_ptr.vmem [resolvable:$true] %s19
      %22 = dma.hbm_to_vmem [thread:$0]  %s0, 64, %s20, [#allocation3]
    $region5: #{tpu_custom_call.1} parent=1 // pred_fallthru
      _
    // Predicated region
    $region6: #{tpu_custom_call.1} parent=1 // pred_check
      _
    $region7: #{tpu_custom_call.1} parent=1 // pred_check_branch
      %24 = sbr.rel (0) target = $region9
    $region8: #{tpu_custom_call.1} parent=1 // pred_region
      %s26 = ssub.s32 1024, 1024
      %27 = vsyncadd [#allocation6], %s26
      %s28 = sshll.u32 [#allocation5], 4
      %s29 = int_to_ptr.vmem [resolvable:$true] %s28
      %34 = dma.hbm_to_vmem [thread:$0]  %s1, 1024, %s29, [#allocation6], 64, 64, 4
    $region9: #{tpu_custom_call.1} parent=1 // pred_fallthru
      _
    // Predicated region
    $region10: #{tpu_custom_call.1} parent=1 // pred_check
      _
    $region11: #{tpu_custom_call.1} parent=1 // pred_check_branch
      %36 = sbr.rel (0) target = $region13
    $region12: #{tpu_custom_call.1} parent=1 // pred_region
      _
    $region13: #{tpu_custom_call.1} parent=1 // pred_fallthru
      _
    // Predicated region
    $region14: #{tpu_custom_call.1} parent=1 // pred_check
      _
    $region15: #{tpu_custom_call.1} parent=1 // pred_check_branch
      %38 = sbr.rel (0) target = $region17
    $region16: #{tpu_custom_call.1} parent=1 // pred_region
      %s40 = ssub.s32 1024, 1024
      %41 = vsyncadd [#allocation6], %s40
      %s42 = sshll.u32 [#allocation7], 4
      %s43 = int_to_ptr.vmem [resolvable:$true] %s42
      %48 = dma.hbm_to_vmem [thread:$0]  %s3, 1024, %s43, [#allocation6], 64, 64, 4
    $region17: #{tpu_custom_call.1} parent=1 // pred_fallthru
      _
    // Predicated region
    $region18: #{tpu_custom_call.1} parent=1 // pred_check
      _
    $region19: #{tpu_custom_call.1} parent=1 // pred_check_branch
      %50 = sbr.rel (0) target = $region21
    $region20: #{tpu_custom_call.1} parent=1 // pred_region
      _
    $region21: #{tpu_custom_call.1} parent=1 // pred_fallthru
      _
    // Predicated region
    $region22: #{tpu_custom_call.1} parent=1 // pred_check
      _
    $region23: #{tpu_custom_call.1} parent=1 // pred_check_branch
      %52 = sbr.rel (0) target = $region25
    $region24: #{tpu_custom_call.1} parent=1 // pred_region
      %53 = dma.done [#allocation3], 64
    $region25: #{tpu_custom_call.1} parent=1 // pred_fallthru
      _
    // Predicated region
    $region26: #{tpu_custom_call.1} parent=1 // pred_check
      _
    $region27: #{tpu_custom_call.1} parent=1 // pred_check_branch
      %55 = sbr.rel (0) target = $region29
    $region28: #{tpu_custom_call.1} parent=1 // pred_region
      %56 = dma.done [#allocation6], 1024
    $region29: #{tpu_custom_call.1} parent=1 // pred_fallthru
      _
    // Predicated region
    $region30: #{tpu_custom_call.1} parent=1 // pred_check
      _
    $region31: #{tpu_custom_call.1} parent=1 // pred_check_branch
      %58 = sbr.rel (0) target = $region33
    $region32: #{tpu_custom_call.1} parent=1 // pred_region
      %59 = dma.done [#allocation6], 1024
    $region33: #{tpu_custom_call.1} parent=1 // pred_fallthru
      _
    %p61 = scmp.eq.s32.totalorder 0, 0
    // Predicated region
    $region34: #{tpu_custom_call.1} parent=1 // pred_check
      %p62 = pneg %p61
    $region35: #{tpu_custom_call.1} parent=1 // pred_check_branch
      %64 = sbr.rel (%p62) target = $region37
    $region36: #{tpu_custom_call.1} parent=1 // pred_region
      %65 = vst [vmem:[#allocation8] sm:$0xff] 0.0
    $region37: #{tpu_custom_call.1} parent=1 // pred_fallthru
      _
    %v66 = vld [vmem:[%s2] sm:$0x7]
    %v67 = vld [vmem:[#allocation2] sm:$0xf]
    %v68 = vld [vmem:[#allocation5] sm:$0xf]
    %v69 = vld [vmem:[#allocation5 + $0x4] sm:$0xf]
    %v70 = vld [vmem:[#allocation5 + $0x8] sm:$0xf]
    %v71 = vld [vmem:[#allocation5 + $0xc] sm:$0xf]
    %v72 = vld [vmem:[#allocation5 + $0x10] sm:$0xf]
    %v73 = vld [vmem:[#allocation5 + $0x14] sm:$0xf]
    %v74 = vld [vmem:[#allocation5 + $0x18] sm:$0xf]
    %v75 = vld [vmem:[#allocation5 + $0x1c] sm:$0xf]
    %v76 = vld [vmem:[#allocation5 + $0x20] sm:$0xf]
    %v77 = vld [vmem:[#allocation5 + $0x24] sm:$0xf]
    %v78 = vld [vmem:[#allocation5 + $0x28] sm:$0xf]
    %v79 = vld [vmem:[#allocation5 + $0x2c] sm:$0xf]
    %v80 = vld [vmem:[#allocation5 + $0x30] sm:$0xf]
    %v81 = vld [vmem:[#allocation5 + $0x34] sm:$0xf]
    %v82 = vld [vmem:[#allocation5 + $0x38] sm:$0xf]
    %v83 = vld [vmem:[#allocation5 + $0x3c] sm:$0xf]
    %v84 = vlaneseq
    %v85 = vshrl.u32 %v84, 7
    %v86 = vsub.s32 0, %v85
    %v87 = vrot.slane %v66, %v86
    %v104 = vunpack.c.l.b16 %v68
    %v105 = vunpack.c.l.b16 %v69
    %v106 = vunpack.c.l.b16 %v70
    %v107 = vunpack.c.l.b16 %v71
    %v108 = vunpack.c.l.b16 %v72
    %v109 = vunpack.c.l.b16 %v73
    %v110 = vunpack.c.l.b16 %v74
    %v111 = vunpack.c.l.b16 %v75
    %v112 = vunpack.c.l.b16 %v76
    %v113 = vunpack.c.l.b16 %v77
    %v114 = vunpack.c.l.b16 %v78
    %v115 = vunpack.c.l.b16 %v79
    %v116 = vunpack.c.l.b16 %v80
    %v117 = vunpack.c.l.b16 %v81
    %v118 = vunpack.c.l.b16 %v82
    %v119 = vunpack.c.l.b16 %v83
    %v120 = vpack.c.b16 %v105, %v104
    %v121 = vpack.c.b16 %v107, %v106
    %v122 = vpack.c.b16 %v109, %v108
    %v123 = vpack.c.b16 %v111, %v110
    %v124 = vpack.c.b16 %v113, %v112
    %v125 = vpack.c.b16 %v115, %v114
    %v126 = vpack.c.b16 %v117, %v116
    %v127 = vpack.c.b16 %v119, %v118
    %136 = vmatprep.subr.bf16.mxu0 0
    %137 = vmatpush1.bf16.msra.mxu0 %v120
    %138 = vmatprep.subr.bf16.mxu0 0
    %139 = vmatpush1.bf16.msra.mxu0 %v121
    %140 = vmatprep.subr.bf16.mxu0 0
    %141 = vmatpush1.bf16.msra.mxu0 %v122
    %142 = vmatprep.subr.bf16.mxu0 0
    %143 = vmatpush1.bf16.msra.mxu0 %v123
    %144 = vmatprep.subr.bf16.mxu0 0
    %145 = vmatpush1.bf16.msra.mxu0 %v124
    %146 = vmatprep.subr.bf16.mxu0 0
    %147 = vmatpush1.bf16.msra.mxu0 %v125
    %148 = vmatprep.subr.bf16.mxu0 0
    %149 = vmatpush1.bf16.msra.mxu0 %v126
    %150 = vmatprep.subr.bf16.mxu0 0
    %151 = vmatpush1.bf16.msra.mxu0 %v127
    %152 = vmatprep.subr.bf16.mxu0 0
    %153 = vmatpush1.bf16.msra.mxu0 0
    %154 = vmatprep.subr.bf16.mxu0 0
    %155 = vmatpush1.bf16.msra.mxu0 0
    %156 = vmatprep.subr.bf16.mxu0 0
    %157 = vmatpush1.bf16.msra.mxu0 0
    %158 = vmatprep.subr.bf16.mxu0 0
    %159 = vmatpush1.bf16.msra.mxu0 0
    %160 = vmatprep.subr.bf16.mxu0 0
    %161 = vmatpush1.bf16.msra.mxu0 0
    %162 = vmatprep.subr.bf16.mxu0 0
    %163 = vmatpush1.bf16.msra.mxu0 0
    %164 = vmatprep.subr.bf16.mxu0 0
    %165 = vmatpush1.bf16.msra.mxu0 0
    %166 = vmatprep.subr.bf16.mxu0 0
    %167 = vmatpush1.bf16.msra.mxu0 0
    %168 = vmatprep.mubr.bf16.mxu0 0
    %169 = vmatmul.mubr.bf16.gmra.mrb[0].mxu0 %v67
    %v170 = vpop.f32.mrb[0].mxu0
    %v171 = vadd.f32 %v87, %v170
    %v172 = vpop.f32.mrb[0].mxu0
    %v173 = vpop.f32.mrb[0].mxu0
    %v174 = vpop.f32.mrb[0].mxu0
    %175 = vdwg.mxu0
    %v176 = vrot.slane %v171, 4
    %v177 = vadd.f32 %v171, %v176
    %v178 = vrot.slane %v177, 2
    %v179 = vadd.f32 %v177, %v178
    %v180 = vrot.slane %v179, 1
    %v181 = vadd.f32 %v179, %v180
    %v182 = vrcp.pop 8.0
    %v183 = vmul.f32 %v181, %v182
    %v184 = vsub.f32 %v171, %v183
    %v185 = vmul.f32 %v184, %v184
    %v186 = vrot.slane %v185, 4
    %v187 = vadd.f32 %v185, %v186
    %v188 = vrot.slane %v187, 2
    %v189 = vadd.f32 %v187, %v188
    %v190 = vrot.slane %v189, 1
    %v191 = vadd.f32 %v189, %v190
    %v192 = vmul.f32 %v191, %v182
    %v193 = vadd.f32 %v192, 1e-05
    %v194 = vrsqrt.pop %v193
    %v195 = vmul.f32 %v184, %v194
    %v196 = vlaneseq
    %v197 = vshrl.u32 %v196, 7
    %v198 = vsub.s32 1, %v197
    %v199 = vrot.slane %v66, %v198
    %v200 = vmul.f32 %v195, %v199
    %v201 = vlaneseq
    %v202 = vshrl.u32 %v201, 7
    %v203 = vsub.s32 2, %v202
    %v204 = vrot.slane %v66, %v203
    %v205 = vadd.f32 %v200, %v204
    %v206 = vmax.f32 %v205, 0.0
    %v207 = vld [vmem:[#allocation8] sm:$0xff]
    %v208 = vpack.c.bf16 %v206, %v206
    %v209 = vld [vmem:[#allocation7] sm:$0xf]
    %v210 = vld [vmem:[#allocation7 + $0x4] sm:$0xf]
    %v211 = vld [vmem:[#allocation7 + $0x8] sm:$0xf]
    %v212 = vld [vmem:[#allocation7 + $0xc] sm:$0xf]
    %v213 = vld [vmem:[#allocation7 + $0x10] sm:$0xf]
    %v214 = vld [vmem:[#allocation7 + $0x14] sm:$0xf]
    %v215 = vld [vmem:[#allocation7 + $0x18] sm:$0xf]
    %v216 = vld [vmem:[#allocation7 + $0x1c] sm:$0xf]
    %v217 = vld [vmem:[#allocation7 + $0x20] sm:$0xf]
    %v218 = vld [vmem:[#allocation7 + $0x24] sm:$0xf]
    %v219 = vld [vmem:[#allocation7 + $0x28] sm:$0xf]
    %v220 = vld [vmem:[#allocation7 + $0x2c] sm:$0xf]
    %v221 = vld [vmem:[#allocation7 + $0x30] sm:$0xf]
    %v222 = vld [vmem:[#allocation7 + $0x34] sm:$0xf]
    %v223 = vld [vmem:[#allocation7 + $0x38] sm:$0xf]
    %v224 = vld [vmem:[#allocation7 + $0x3c] sm:$0xf]
    %v241 = vunpack.c.l.b16 %v209
    %v242 = vunpack.c.l.b16 %v210
    %v243 = vunpack.c.l.b16 %v211
    %v244 = vunpack.c.l.b16 %v212
    %v245 = vunpack.c.l.b16 %v213
    %v246 = vunpack.c.l.b16 %v214
    %v247 = vunpack.c.l.b16 %v215
    %v248 = vunpack.c.l.b16 %v216
    %v249 = vunpack.c.l.b16 %v217
    %v250 = vunpack.c.l.b16 %v218
    %v251 = vunpack.c.l.b16 %v219
    %v252 = vunpack.c.l.b16 %v220
    %v253 = vunpack.c.l.b16 %v221
    %v254 = vunpack.c.l.b16 %v222
    %v255 = vunpack.c.l.b16 %v223
    %v256 = vunpack.c.l.b16 %v224
    %v257 = vpack.c.b16 %v242, %v241
    %v258 = vpack.c.b16 %v244, %v243
    %v259 = vpack.c.b16 %v246, %v245
    %v260 = vpack.c.b16 %v248, %v247
    %v261 = vpack.c.b16 %v250, %v249
    %v262 = vpack.c.b16 %v252, %v251
    %v263 = vpack.c.b16 %v254, %v253
    %v264 = vpack.c.b16 %v256, %v255
    %273 = vmatprep.subr.bf16.mxu0 0
    %274 = vmatpush1.bf16.msra.mxu0 %v257
    %275 = vmatprep.subr.bf16.mxu0 0
    %276 = vmatpush1.bf16.msra.mxu0 %v258
    %277 = vmatprep.subr.bf16.mxu0 0
    %278 = vmatpush1.bf16.msra.mxu0 %v259
    %279 = vmatprep.subr.bf16.mxu0 0
    %280 = vmatpush1.bf16.msra.mxu0 %v260
    %281 = vmatprep.subr.bf16.mxu0 0
    %282 = vmatpush1.bf16.msra.mxu0 %v261
    %283 = vmatprep.subr.bf16.mxu0 0
    %284 = vmatpush1.bf16.msra.mxu0 %v262
    %285 = vmatprep.subr.bf16.mxu0 0
    %286 = vmatpush1.bf16.msra.mxu0 %v263
    %287 = vmatprep.subr.bf16.mxu0 0
    %288 = vmatpush1.bf16.msra.mxu0 %v264
    %289 = vmatprep.subr.bf16.mxu0 0
    %290 = vmatpush1.bf16.msra.mxu0 0
    %291 = vmatprep.subr.bf16.mxu0 0
    %292 = vmatpush1.bf16.msra.mxu0 0
    %293 = vmatprep.subr.bf16.mxu0 0
    %294 = vmatpush1.bf16.msra.mxu0 0
    %295 = vmatprep.subr.bf16.mxu0 0
    %296 = vmatpush1.bf16.msra.mxu0 0
    %297 = vmatprep.subr.bf16.mxu0 0
    %298 = vmatpush1.bf16.msra.mxu0 0
    %299 = vmatprep.subr.bf16.mxu0 0
    %300 = vmatpush1.bf16.msra.mxu0 0
    %301 = vmatprep.subr.bf16.mxu0 0
    %302 = vmatpush1.bf16.msra.mxu0 0
    %303 = vmatprep.subr.bf16.mxu0 0
    %304 = vmatpush1.bf16.msra.mxu0 0
    %305 = vmatprep.mubr.bf16.mxu0 0
    %306 = vmatmul.mubr.bf16.gmra.mrb[0].mxu0 %v208
    %v307 = vpop.f32.mrb[0].mxu0
    %v308 = vadd.f32 0.0, %v307
    %v309 = vpop.f32.mrb[0].mxu0
    %v310 = vpop.f32.mrb[0].mxu0
    %v311 = vpop.f32.mrb[0].mxu0
    %312 = vdwg.mxu0
    %v313 = vadd.f32 %v207, %v308
    %314 = vst [vmem:[#allocation8] sm:$0xff] %v313
    // Predicated region
    $region38: #{tpu_custom_call.1} parent=1 // pred_check
      %p315 = pneg %p61
    $region39: #{tpu_custom_call.1} parent=1 // pred_check_branch
      %317 = sbr.rel (%p315) target = $region41
    $region40: #{tpu_custom_call.1} parent=1 // pred_region
      %v318 = vld [vmem:[%s4] sm:$0x7]
      %v319 = vld [vmem:[#allocation8] sm:$0xff]
      %v320 = vlaneseq
      %v321 = vshrl.u32 %v320, 7
      %v322 = vsub.s32 0, %v321
      %v323 = vrot.slane %v318, %v322
      %v324 = vadd.f32 %v319, %v323
      %v325 = vrot.slane %v324, 4
      %v326 = vadd.f32 %v324, %v325
      %v327 = vrot.slane %v326, 2
      %v328 = vadd.f32 %v326, %v327
      %v329 = vrot.slane %v328, 1
      %v330 = vadd.f32 %v328, %v329
      %v331 = vmul.f32 %v330, %v182
      %v332 = vsub.f32 %v324, %v331
      %v333 = vmul.f32 %v332, %v332
      %v334 = vrot.slane %v333, 4
      %v335 = vadd.f32 %v333, %v334
      %v336 = vrot.slane %v335, 2
      %v337 = vadd.f32 %v335, %v336
      %v338 = vrot.slane %v337, 1
      %v339 = vadd.f32 %v337, %v338
      %v340 = vmul.f32 %v339, %v182
      %v341 = vadd.f32 %v340, 1e-05
      %v342 = vrsqrt.pop %v341
      %v343 = vmul.f32 %v332, %v342
      %v344 = vlaneseq
      %v345 = vshrl.u32 %v344, 7
      %v346 = vsub.s32 1, %v345
      %v347 = vrot.slane %v318, %v346
      %v348 = vmul.f32 %v343, %v347
      %v349 = vlaneseq
      %v350 = vshrl.u32 %v349, 7
      %v351 = vsub.s32 2, %v350
      %v352 = vrot.slane %v318, %v351
      %v353 = vadd.f32 %v348, %v352
      %354 = vst [vmem:[#allocation8] sm:$0xff] %v353
    $region41: #{tpu_custom_call.1} parent=1 // pred_fallthru
      _
    // Predicated region
    $region42: #{tpu_custom_call.1} parent=1 // pred_check
      _
    $region43: #{tpu_custom_call.1} parent=1 // pred_check_branch
      %356 = sbr.rel (0) target = $region45
    $region44: #{tpu_custom_call.1} parent=1 // pred_region
      %s358 = ssub.s32 128, 128
      %359 = vsyncadd [#allocation4], %s358
      %s361 = sshll.u32 [#allocation8], 4
      %s362 = int_to_ptr.vmem [resolvable:$true] %s361
      %364 = dma.vmem_to_hbm [thread:$0]  %s362, 128, %s5, [#allocation4]
    $region45: #{tpu_custom_call.1} parent=1 // pred_fallthru
      _
    // Predicated region
    $region46: #{tpu_custom_call.1} parent=1 // pred_check
      _
    $region47: #{tpu_custom_call.1} parent=1 // pred_check_branch
      %366 = sbr.rel (0) target = $region49
    $region48: #{tpu_custom_call.1} parent=1 // pred_region
      %367 = dma.done [#allocation4], 128
    $region49: #{tpu_custom_call.1} parent=1 // pred_fallthru
      _
    %368 = vsyncpa [#allocation3], 1
    %369 = vsyncpa [#allocation6], 1
    %370 = vsyncpa [#allocation4], 1

// kernel: tpu_custom_call.1
$region0: #{tpu_custom_call.1}
  #allocation0 [shape = 'u32[]', space=smem, size = 0x4, offset = 0x4, fixed_abs, tag = 'smem constant byte address 0x4 - core index']
  #allocation1 [shape = 'u32[144,128]{1,0:T(1,128)}', space=vmem, size = 0x12000, scoped, tag = 'internal scratch']
  %s0 = inlined_call_operand.hbm [shape: bf16[8,128], index: 0, kind: input, shape index: {}]
  %s1 = inlined_call_operand.hbm [shape: bf16[128,128], index: 1, kind: input, shape index: {}]
  %s2 = inlined_call_operand.vmem [shape: f32[3,128], index: 2, kind: input, shape index: {}]
  %s3 = inlined_call_operand.hbm [shape: bf16[128,128], index: 3, kind: input, shape index: {}]
  %s4 = inlined_call_operand.vmem [shape: f32[3,128], index: 4, kind: input, shape index: {}]
  %s5 = inlined_call_operand.hbm [shape: f32[8,128], index: 5, kind: output, shape index: {}]
  %s6 = sld [smem:[#allocation0]]
  $region50: #{tpu_custom_call.1} parent=0
    _
  %s8 = ssub.s32 1, %s6
  %s9 = scalar_select 0, %s8, %s6
  $region1: #{tpu_custom_call.1} parent=0
    #allocation2 [shape = 'u8[2048]{0}', space=vmem, size = 0x800, scoped, tag = 'input window, operand 0, single buffered']
    #allocation3 [shape = 's32[1]{0}', space=sflag, size = 0x4, scoped, tag = 'scoped memory for tpu_custom_call.1']
    #allocation4 [shape = 's32[1]{0}', space=sflag, size = 0x4, scoped, tag = 'scoped memory for tpu_custom_call.1']
    #allocation5 [shape = 'u8[32768]{0}', space=vmem, size = 0x8000, scoped, tag = 'input window, operand 1, single buffered']
    #allocation6 [shape = 's32[1]{0}', space=sflag, size = 0x4, scoped, tag = 'scoped memory for tpu_custom_call.1']
    #allocation7 [shape = 'u8[32768]{0}', space=vmem, size = 0x8000, scoped, tag = 'input window, operand 3, single buffered']
    #allocation8 [shape = 'u8[4096]{0}', space=vmem, size = 0x1000, scoped, tag = 'output window, operand 0, single buffered']
    %10 = vsyncpa [#allocation3], 0
    %11 = vsyncpa [#allocation6], 0
    %12 = vsyncpa [#allocation4], 0
    // Predicated region
    $region2: #{tpu_custom_call.1} parent=1 // pred_check
      _
    $region3: #{tpu_custom_call.1} parent=1 // pred_check_branch
      %14 = sbr.rel (0) target = $region5
    $region4: #{tpu_custom_call.1} parent=1 // pred_region
      %s16 = ssub.s32 64, 64
      %17 = vsyncadd [#allocation3], %s16
      %s19 = sshll.u32 [#allocation2], 4
      %s20 = int_to_ptr.vmem [resolvable:$true] %s19
      %22 = dma.hbm_to_vmem [thread:$0]  %s0, 64, %s20, [#allocation3]
    $region5: #{tpu_custom_call.1} parent=1 // pred_fallthru
      _
    // Predicated region
    $region6: #{tpu_custom_call.1} parent=1 // pred_check
      _
    $region7: #{tpu_custom_call.1} parent=1 // pred_check_branch
      %24 = sbr.rel (0) target = $region9
    $region8: #{tpu_custom_call.1} parent=1 // pred_region
      %s26 = ssub.s32 1024, 1024
      %27 = vsyncadd [#allocation6], %s26
      %s28 = sshll.u32 [#allocation5], 4
      %s29 = int_to_ptr.vmem [resolvable:$true] %s28
      %34 = dma.hbm_to_vmem [thread:$0]  %s1, 1024, %s29, [#allocation6], 64, 64, 4
    $region9: #{tpu_custom_call.1} parent=1 // pred_fallthru
      _
    // Predicated region
    $region10: #{tpu_custom_call.1} parent=1 // pred_check
      _
    $region11: #{tpu_custom_call.1} parent=1 // pred_check_branch
      %36 = sbr.rel (0) target = $region13
    $region12: #{tpu_custom_call.1} parent=1 // pred_region
      _
    $region13: #{tpu_custom_call.1} parent=1 // pred_fallthru
      _
    // Predicated region
    $region14: #{tpu_custom_call.1} parent=1 // pred_check
      _
    $region15: #{tpu_custom_call.1} parent=1 // pred_check_branch
      %38 = sbr.rel (0) target = $region17
    $region16: #{tpu_custom_call.1} parent=1 // pred_region
      %s40 = ssub.s32 1024, 1024
      %41 = vsyncadd [#allocation6], %s40
      %s42 = sshll.u32 [#allocation7], 4
      %s43 = int_to_ptr.vmem [resolvable:$true] %s42
      %48 = dma.hbm_to_vmem [thread:$0]  %s3, 1024, %s43, [#allocation6], 64, 64, 4
    $region17: #{tpu_custom_call.1} parent=1 // pred_fallthru
      _
    // Predicated region
    $region18: #{tpu_custom_call.1} parent=1 // pred_check
      _
    $region19: #{tpu_custom_call.1} parent=1 // pred_check_branch
      %50 = sbr.rel (0) target = $region21
    $region20: #{tpu_custom_call.1} parent=1 // pred_region
      _
    $region21: #{tpu_custom_call.1} parent=1 // pred_fallthru
      _
    // Predicated region
    $region22: #{tpu_custom_call.1} parent=1 // pred_check
      _
    $region23: #{tpu_custom_call.1} parent=1 // pred_check_branch
      %52 = sbr.rel (0) target = $region25
    $region24: #{tpu_custom_call.1} parent=1 // pred_region
      %53 = dma.done [#allocation3], 64
    $region25: #{tpu_custom_call.1} parent=1 // pred_fallthru
      _
    // Predicated region
    $region26: #{tpu_custom_call.1} parent=1 // pred_check
      _
    $region27: #{tpu_custom_call.1} parent=1 // pred_check_branch
      %55 = sbr.rel (0) target = $region29
    $region28: #{tpu_custom_call.1} parent=1 // pred_region
      %56 = dma.done [#allocation6], 1024
    $region29: #{tpu_custom_call.1} parent=1 // pred_fallthru
      _
    // Predicated region
    $region30: #{tpu_custom_call.1} parent=1 // pred_check
      _
    $region31: #{tpu_custom_call.1} parent=1 // pred_check_branch
      %58 = sbr.rel (0) target = $region33
    $region32: #{tpu_custom_call.1} parent=1 // pred_region
      %59 = dma.done [#allocation6], 1024
    $region33: #{tpu_custom_call.1} parent=1 // pred_fallthru
      _
    %p61 = scmp.eq.s32.totalorder 0, 0
    // Predicated region
    $region34: #{tpu_custom_call.1} parent=1 // pred_check
      %p62 = pneg %p61
    $region35: #{tpu_custom_call.1} parent=1 // pred_check_branch
      %64 = sbr.rel (%p62) target = $region37
    $region36: #{tpu_custom_call.1} parent=1 // pred_region
      %65 = vst [vmem:[#allocation8] sm:$0xff] 0.0
    $region37: #{tpu_custom_call.1} parent=1 // pred_fallthru
      _
    %v66 = vld [vmem:[%s2] sm:$0x7]
    %v67 = vld [vmem:[#allocation2] sm:$0xf]
    %v68 = vld [vmem:[#allocation5] sm:$0xf]
    %v69 = vld [vmem:[#allocation5 + $0x4] sm:$0xf]
    %v70 = vld [vmem:[#allocation5 + $0x8] sm:$0xf]
    %v71 = vld [vmem:[#allocation5 + $0xc] sm:$0xf]
    %v72 = vld [vmem:[#allocation5 + $0x10] sm:$0xf]
    %v73 = vld [vmem:[#allocation5 + $0x14] sm:$0xf]
    %v74 = vld [vmem:[#allocation5 + $0x18] sm:$0xf]
    %v75 = vld [vmem:[#allocation5 + $0x1c] sm:$0xf]
    %v76 = vld [vmem:[#allocation5 + $0x20] sm:$0xf]
    %v77 = vld [vmem:[#allocation5 + $0x24] sm:$0xf]
    %v78 = vld [vmem:[#allocation5 + $0x28] sm:$0xf]
    %v79 = vld [vmem:[#allocation5 + $0x2c] sm:$0xf]
    %v80 = vld [vmem:[#allocation5 + $0x30] sm:$0xf]
    %v81 = vld [vmem:[#allocation5 + $0x34] sm:$0xf]
    %v82 = vld [vmem:[#allocation5 + $0x38] sm:$0xf]
    %v83 = vld [vmem:[#allocation5 + $0x3c] sm:$0xf]
    %v84 = vlaneseq
    %v85 = vshrl.u32 %v84, 7
    %v86 = vsub.s32 0, %v85
    %v87 = vrot.slane %v66, %v86
    %v104 = vunpack.c.l.b16 %v68
    %v105 = vunpack.c.l.b16 %v69
    %v106 = vunpack.c.l.b16 %v70
    %v107 = vunpack.c.l.b16 %v71
    %v108 = vunpack.c.l.b16 %v72
    %v109 = vunpack.c.l.b16 %v73
    %v110 = vunpack.c.l.b16 %v74
    %v111 = vunpack.c.l.b16 %v75
    %v112 = vunpack.c.l.b16 %v76
    %v113 = vunpack.c.l.b16 %v77
    %v114 = vunpack.c.l.b16 %v78
    %v115 = vunpack.c.l.b16 %v79
    %v116 = vunpack.c.l.b16 %v80
    %v117 = vunpack.c.l.b16 %v81
    %v118 = vunpack.c.l.b16 %v82
    %v119 = vunpack.c.l.b16 %v83
    %v120 = vpack.c.b16 %v105, %v104
    %v121 = vpack.c.b16 %v107, %v106
    %v122 = vpack.c.b16 %v109, %v108
    %v123 = vpack.c.b16 %v111, %v110
    %v124 = vpack.c.b16 %v113, %v112
    %v125 = vpack.c.b16 %v115, %v114
    %v126 = vpack.c.b16 %v117, %v116
    %v127 = vpack.c.b16 %v119, %v118
    %136 = vmatprep.subr.bf16.mxu0 0
    %137 = vmatpush1.bf16.msra.mxu0 %v120
    %138 = vmatprep.subr.bf16.mxu0 0
    %139 = vmatpush1.bf16.msra.mxu0 %v121
    %140 = vmatprep.subr.bf16.mxu0 0
    %141 = vmatpush1.bf16.msra.mxu0 %v122
    %142 = vmatprep.subr.bf16.mxu0 0
    %143 = vmatpush1.bf16.msra.mxu0 %v123
    %144 = vmatprep.subr.bf16.mxu0 0
    %145 = vmatpush1.bf16.msra.mxu0 %v124
    %146 = vmatprep.subr.bf16.mxu0 0
    %147 = vmatpush1.bf16.msra.mxu0 %v125
    %148 = vmatprep.subr.bf16.mxu0 0
    %149 = vmatpush1.bf16.msra.mxu0 %v126
    %150 = vmatprep.subr.bf16.mxu0 0
    %151 = vmatpush1.bf16.msra.mxu0 %v127
    %152 = vmatprep.subr.bf16.mxu0 0
    %153 = vmatpush1.bf16.msra.mxu0 0
    %154 = vmatprep.subr.bf16.mxu0 0
    %155 = vmatpush1.bf16.msra.mxu0 0
    %156 = vmatprep.subr.bf16.mxu0 0
    %157 = vmatpush1.bf16.msra.mxu0 0
    %158 = vmatprep.subr.bf16.mxu0 0
    %159 = vmatpush1.bf16.msra.mxu0 0
    %160 = vmatprep.subr.bf16.mxu0 0
    %161 = vmatpush1.bf16.msra.mxu0 0
    %162 = vmatprep.subr.bf16.mxu0 0
    %163 = vmatpush1.bf16.msra.mxu0 0
    %164 = vmatprep.subr.bf16.mxu0 0
    %165 = vmatpush1.bf16.msra.mxu0 0
    %166 = vmatprep.subr.bf16.mxu0 0
    %167 = vmatpush1.bf16.msra.mxu0 0
    %168 = vmatprep.mubr.bf16.mxu0 0
    %169 = vmatmul.mubr.bf16.gmra.mrb[0].mxu0 %v67
    %v170 = vpop.f32.mrb[0].mxu0
    %v171 = vadd.f32 %v87, %v170
    %v172 = vpop.f32.mrb[0].mxu0
    %v173 = vpop.f32.mrb[0].mxu0
    %v174 = vpop.f32.mrb[0].mxu0
    %175 = vdwg.mxu0
    %v176 = vrot.slane %v171, 4
    %v177 = vadd.f32 %v171, %v176
    %v178 = vrot.slane %v177, 2
    %v179 = vadd.f32 %v177, %v178
    %v180 = vrot.slane %v179, 1
    %v181 = vadd.f32 %v179, %v180
    %v182 = vrcp.pop 8.0
    %v183 = vmul.f32 %v181, %v182
    %v184 = vsub.f32 %v171, %v183
    %v185 = vmul.f32 %v184, %v184
    %v186 = vrot.slane %v185, 4
    %v187 = vadd.f32 %v185, %v186
    %v188 = vrot.slane %v187, 2
    %v189 = vadd.f32 %v187, %v188
    %v190 = vrot.slane %v189, 1
    %v191 = vadd.f32 %v189, %v190
    %v192 = vmul.f32 %v191, %v182
    %v193 = vadd.f32 %v192, 1e-05
    %v194 = vrsqrt.pop %v193
    %v195 = vmul.f32 %v184, %v194
    %v196 = vlaneseq
    %v197 = vshrl.u32 %v196, 7
    %v198 = vsub.s32 1, %v197
    %v199 = vrot.slane %v66, %v198
    %v200 = vmul.f32 %v195, %v199
    %v201 = vlaneseq
    %v202 = vshrl.u32 %v201, 7
    %v203 = vsub.s32 2, %v202
    %v204 = vrot.slane %v66, %v203
    %v205 = vadd.f32 %v200, %v204
    %v206 = vmax.f32 %v205, 0.0
    %v207 = vld [vmem:[#allocation8] sm:$0xff]
    %v208 = vpack.c.bf16 %v206, %v206
    %v209 = vld [vmem:[#allocation7] sm:$0xf]
    %v210 = vld [vmem:[#allocation7 + $0x4] sm:$0xf]
    %v211 = vld [vmem:[#allocation7 + $0x8] sm:$0xf]
    %v212 = vld [vmem:[#allocation7 + $0xc] sm:$0xf]
    %v213 = vld [vmem:[#allocation7 + $0x10] sm:$0xf]
    %v214 = vld [vmem:[#allocation7 + $0x14] sm:$0xf]
    %v215 = vld [vmem:[#allocation7 + $0x18] sm:$0xf]
    %v216 = vld [vmem:[#allocation7 + $0x1c] sm:$0xf]
    %v217 = vld [vmem:[#allocation7 + $0x20] sm:$0xf]
    %v218 = vld [vmem:[#allocation7 + $0x24] sm:$0xf]
    %v219 = vld [vmem:[#allocation7 + $0x28] sm:$0xf]
    %v220 = vld [vmem:[#allocation7 + $0x2c] sm:$0xf]
    %v221 = vld [vmem:[#allocation7 + $0x30] sm:$0xf]
    %v222 = vld [vmem:[#allocation7 + $0x34] sm:$0xf]
    %v223 = vld [vmem:[#allocation7 + $0x38] sm:$0xf]
    %v224 = vld [vmem:[#allocation7 + $0x3c] sm:$0xf]
    %v241 = vunpack.c.l.b16 %v209
    %v242 = vunpack.c.l.b16 %v210
    %v243 = vunpack.c.l.b16 %v211
    %v244 = vunpack.c.l.b16 %v212
    %v245 = vunpack.c.l.b16 %v213
    %v246 = vunpack.c.l.b16 %v214
    %v247 = vunpack.c.l.b16 %v215
    %v248 = vunpack.c.l.b16 %v216
    %v249 = vunpack.c.l.b16 %v217
    %v250 = vunpack.c.l.b16 %v218
    %v251 = vunpack.c.l.b16 %v219
    %v252 = vunpack.c.l.b16 %v220
    %v253 = vunpack.c.l.b16 %v221
    %v254 = vunpack.c.l.b16 %v222
    %v255 = vunpack.c.l.b16 %v223
    %v256 = vunpack.c.l.b16 %v224
    %v257 = vpack.c.b16 %v242, %v241
    %v258 = vpack.c.b16 %v244, %v243
    %v259 = vpack.c.b16 %v246, %v245
    %v260 = vpack.c.b16 %v248, %v247
    %v261 = vpack.c.b16 %v250, %v249
    %v262 = vpack.c.b16 %v252, %v251
    %v263 = vpack.c.b16 %v254, %v253
    %v264 = vpack.c.b16 %v256, %v255
    %273 = vmatprep.subr.bf16.mxu0 0
    %274 = vmatpush1.bf16.msra.mxu0 %v257
    %275 = vmatprep.subr.bf16.mxu0 0
    %276 = vmatpush1.bf16.msra.mxu0 %v258
    %277 = vmatprep.subr.bf16.mxu0 0
    %278 = vmatpush1.bf16.msra.mxu0 %v259
    %279 = vmatprep.subr.bf16.mxu0 0
    %280 = vmatpush1.bf16.msra.mxu0 %v260
    %281 = vmatprep.subr.bf16.mxu0 0
    %282 = vmatpush1.bf16.msra.mxu0 %v261
    %283 = vmatprep.subr.bf16.mxu0 0
    %284 = vmatpush1.bf16.msra.mxu0 %v262
    %285 = vmatprep.subr.bf16.mxu0 0
    %286 = vmatpush1.bf16.msra.mxu0 %v263
    %287 = vmatprep.subr.bf16.mxu0 0
    %288 = vmatpush1.bf16.msra.mxu0 %v264
    %289 = vmatprep.subr.bf16.mxu0 0
    %290 = vmatpush1.bf16.msra.mxu0 0
    %291 = vmatprep.subr.bf16.mxu0 0
    %292 = vmatpush1.bf16.msra.mxu0 0
    %293 = vmatprep.subr.bf16.mxu0 0
    %294 = vmatpush1.bf16.msra.mxu0 0
    %295 = vmatprep.subr.bf16.mxu0 0
    %296 = vmatpush1.bf16.msra.mxu0 0
    %297 = vmatprep.subr.bf16.mxu0 0
    %298 = vmatpush1.bf16.msra.mxu0 0
    %299 = vmatprep.subr.bf16.mxu0 0
    %300 = vmatpush1.bf16.msra.mxu0 0
    %301 = vmatprep.subr.bf16.mxu0 0
    %302 = vmatpush1.bf16.msra.mxu0 0
    %303 = vmatprep.subr.bf16.mxu0 0
    %304 = vmatpush1.bf16.msra.mxu0 0
    %305 = vmatprep.mubr.bf16.mxu0 0
    %306 = vmatmul.mubr.bf16.gmra.mrb[0].mxu0 %v208
    %v307 = vpop.f32.mrb[0].mxu0
    %v308 = vadd.f32 0.0, %v307
    %v309 = vpop.f32.mrb[0].mxu0
    %v310 = vpop.f32.mrb[0].mxu0
    %v311 = vpop.f32.mrb[0].mxu0
    %312 = vdwg.mxu0
    %v313 = vadd.f32 %v207, %v308
    %314 = vst [vmem:[#allocation8] sm:$0xff] %v313
    // Predicated region
    $region38: #{tpu_custom_call.1} parent=1 // pred_check
      %p315 = pneg %p61
    $region39: #{tpu_custom_call.1} parent=1 // pred_check_branch
      %317 = sbr.rel (%p315) target = $region41
    $region40: #{tpu_custom_call.1} parent=1 // pred_region
      %v318 = vld [vmem:[%s4] sm:$0x7]
      %v319 = vld [vmem:[#allocation8] sm:$0xff]
      %v320 = vlaneseq
      %v321 = vshrl.u32 %v320, 7
      %v322 = vsub.s32 0, %v321
      %v323 = vrot.slane %v318, %v322
      %v324 = vadd.f32 %v319, %v323
      %v325 = vrot.slane %v324, 4
      %v326 = vadd.f32 %v324, %v325
      %v327 = vrot.slane %v326, 2
      %v328 = vadd.f32 %v326, %v327
      %v329 = vrot.slane %v328, 1
      %v330 = vadd.f32 %v328, %v329
      %v331 = vmul.f32 %v330, %v182
      %v332 = vsub.f32 %v324, %v331
      %v333 = vmul.f32 %v332, %v332
      %v334 = vrot.slane %v333, 4
      %v335 = vadd.f32 %v333, %v334
      %v336 = vrot.slane %v335, 2
      %v337 = vadd.f32 %v335, %v336
      %v338 = vrot.slane %v337, 1
      %v339 = vadd.f32 %v337, %v338
      %v340 = vmul.f32 %v339, %v182
      %v341 = vadd.f32 %v340, 1e-05
      %v342 = vrsqrt.pop %v341
      %v343 = vmul.f32 %v332, %v342
      %v344 = vlaneseq
      %v345 = vshrl.u32 %v344, 7
      %v346 = vsub.s32 1, %v345
      %v347 = vrot.slane %v318, %v346
      %v348 = vmul.f32 %v343, %v347
      %v349 = vlaneseq
      %v350 = vshrl.u32 %v349, 7
      %v351 = vsub.s32 2, %v350
      %v352 = vrot.slane %v318, %v351
      %v353 = vadd.f32 %v348, %v352
      %354 = vst [vmem:[#allocation8] sm:$0xff] %v353
    $region41: #{tpu_custom_call.1} parent=1 // pred_fallthru
      _
    // Predicated region
    $region42: #{tpu_custom_call.1} parent=1 // pred_check
      _
    $region43: #{tpu_custom_call.1} parent=1 // pred_check_branch
      %356 = sbr.rel (0) target = $region45
    $region44: #{tpu_custom_call.1} parent=1 // pred_region
      %s358 = ssub.s32 128, 128
      %359 = vsyncadd [#allocation4], %s358
      %s361 = sshll.u32 [#allocation8], 4
      %s362 = int_to_ptr.vmem [resolvable:$true] %s361
      %364 = dma.vmem_to_hbm [thread:$0]  %s362, 128, %s5, [#allocation4]
    $region45: #{tpu_custom_call.1} parent=1 // pred_fallthru
      _
    // Predicated region
    $region46: #{tpu_custom_call.1} parent=1 // pred_check
      _
    $region47: #{tpu_custom_call.1} parent=1 // pred_check_branch
      %366 = sbr.rel (0) target = $region49
    $region48: #{tpu_custom_call.1} parent=1 // pred_region
      %367 = dma.done [#allocation4], 128
    $region49: #{tpu_custom_call.1} parent=1 // pred_fallthru
      _
    %368 = vsyncpa [#allocation3], 1
    %369 = vsyncpa [#allocation6], 1
    %370 = vsyncpa [#allocation4], 1

</llo_original>
